<compile_context>
chip_gen: v5e
topology: v5e:2x2
jax: 0.10.0
libtpu: 0.0.40
codegen_flags: <defaults>
</compile_context>

<pallas_src>
import functools

import jax
import jax.numpy as jnp
from jax.experimental import pallas as pl
from jax.experimental.pallas import tpu as pltpu

NEG_SLOPE = 0.01      # F.leaky_relu default negative_slope
IN_FEATURES = 4
_SUBLANES = 8         # f32 sublane tile


def _round_up(a: int, b: int) -> int:
    return ((a + b - 1) // b) * b


def _cdiv(a: int, b: int) -> int:
    return (a + b - 1) // b


def _encoder_kernel(x_ref, w_ref, b_ref, o_ref):
    # x_ref: (tm, k_fold)  w_ref: (k_fold, d_fold)  b_ref: (1, d_fold)  o_ref: (tm, d_fold)
    y = jnp.dot(x_ref[...], w_ref[...], preferred_element_type=jnp.float32)
    y = y + b_ref[...]
    # leaky_relu: max(y, 0.01*y) is exact for 0 < slope < 1 and is a single vmax
    # (vs cmp+select), trimming VALU work under the store-bound DMA.
    y = jnp.maximum(y, NEG_SLOPE * y)
    o_ref[...] = y.astype(o_ref.dtype)


def _fold_factor(d_model: int) -> int:
    """How many consecutive rows to fold into one 128-lane output row."""
    if d_model % 128 == 0:
        return 1                      # already lane-dense
    if 128 % d_model == 0:
        return 128 // d_model         # e.g. d_model=32 -> fold 4 rows per lane-row
    # Fallback: correct, but output stores are lane-masked (vst.msk).
    return 1


def _fold_params(weight, bias, fold: int):
    """One-time construction of the block-diagonal weight / tiled bias (f32)."""
    w_t = weight.astype(jnp.float32).T                           # (4, d_model)
    d_model = w_t.shape[1]
    if fold > 1:
        w_big = jnp.kron(jnp.eye(fold, dtype=jnp.float32), w_t)  # (4F, d_model*F)
        b_big = jnp.tile(bias.astype(jnp.float32), fold).reshape(1, d_model * fold)
    else:
        w_big = w_t
        b_big = bias.astype(jnp.float32).reshape(1, d_model)
    return w_big, b_big


def _encoder_apply(x, w_big, b_big, d_model: int, fold: int,
                   target_out_tile_bytes: int = 8 * 1024 * 1024):
    lead_shape = x.shape[:-1]
    n = 1
    for s in lead_shape:
        n *= s

    x2d = x.astype(jnp.float32).reshape(n, IN_FEATURES)

    # Only pad to a multiple of `fold` (<= fold-1 rows).  The common case
    # (n % fold == 0) does zero extra HBM work in the wrapper; the partial last
    # grid block is masked by Pallas, so no pad-to-tile is ever needed.
    n_main = _round_up(n, fold)
    pad_rows = n_main - n
    if pad_rows:
        x2d = jnp.pad(x2d, ((0, pad_rows), (0, 0)))

    k_fold = IN_FEATURES * fold
    d_fold = d_model * fold
    n_rows = n_main // fold                       # rows in folded space
    x_fold = x2d.reshape(n_rows, k_fold)          # free row-major reshape

    # Row tile (folded space): ~8 MiB output tiles, sublane aligned.  Whenever
    # the work spans >= 2 sublane tiles, force an even-length, balanced grid so
    # v7x's two TensorCores split the rows evenly ("parallel" axis).
    tm_cap = max(_SUBLANES,
                 (target_out_tile_bytes // (d_fold * 4)) // _SUBLANES * _SUBLANES)
    if n_rows >= 2 * _SUBLANES:
        grid_len = max(2, _cdiv(n_rows, tm_cap))
        if grid_len % 2:
            grid_len += 1
        tm = _round_up(_cdiv(n_rows, grid_len), _SUBLANES)
        grid_len = _cdiv(n_rows, tm)
    else:
        tm = _round_up(max(n_rows, 1), _SUBLANES)
        grid_len = 1

    cost = pl.CostEstimate(
        flops=2 * n_rows * k_fold * d_fold,
        transcendentals=0,
        bytes_accessed=(n_rows * (k_fold + d_fold) + k_fold * d_fold + d_fold) * 4,
    )

    out = pl.pallas_call(
        _encoder_kernel,
        out_shape=jax.ShapeDtypeStruct((n_rows, d_fold), jnp.float32),
        grid_spec=pltpu.PrefetchScalarGridSpec(
            num_scalar_prefetch=0,
            grid=(grid_len,),
            in_specs=[
                pl.BlockSpec((tm, k_fold), lambda i: (i, 0)),   # x row tiles
                pl.BlockSpec((k_fold, d_fold), lambda i: (0, 0)),  # weight, resident
                pl.BlockSpec((1, d_fold), lambda i: (0, 0)),       # bias, resident
            ],
            out_specs=pl.BlockSpec((tm, d_fold), lambda i: (i, 0)),
        ),
        compiler_params=pltpu.CompilerParams(
            dimension_semantics=("parallel",),      # v7x: shard row tiles over 2 TCs
            vmem_limit_bytes=32 * 1024 * 1024,      # covers ~18-20 MiB double-buffered
        ),
        cost_estimate=cost,
    )(x_fold, w_big, b_big)

    out = out.reshape(n_main, d_model)
    if pad_rows:
        out = out[:n]                               # rare path only (n % fold != 0)
    return out.reshape(*lead_shape, d_model)


def make_observation_encoder(weight, bias):
    """Precompute the folded params once; return a jitted apply(x)."""
    d_model = int(weight.shape[0])
    fold = _fold_factor(d_model)
    w_big, b_big = _fold_params(jnp.asarray(weight), jnp.asarray(bias), fold)

    @jax.jit
    def apply(x):
        return _encoder_apply(x, w_big, b_big, d_model, fold)

    return apply


@jax.jit
def observation_encoder(x, weight, bias):
    """One-shot convenience: leaky_relu(x @ weight.T + bias), fully jitted so the
    tiny folded-weight construction fuses and is cached per shape."""
    d_model = weight.shape[0]
    fold = _fold_factor(d_model)
    w_big, b_big = _fold_params(weight, bias, fold)
    return _encoder_apply(x, w_big, b_big, d_model, fold)


if __name__ == "__main__":
    key = jax.random.PRNGKey(0)
    k_x, k_w, k_b = jax.random.split(key, 3)

    batch, seq, in_features, d_model = 2, 8, 4, 32

    # Deterministic params (mimics PyTorch Linear's uniform(-1/sqrt(4), 1/sqrt(4)))
    bound = 1.0 / (in_features ** 0.5)
    weight = jax.random.uniform(k_w, (d_model, in_features), jnp.float32, -bound, bound)
    bias = jax.random.uniform(k_b, (d_model,), jnp.float32, -bound, bound)
    x = jax.random.normal(k_x, (batch, seq, in_features), jnp.float32)

    def ref_fn(xx):
        y = xx @ weight.T + bias
        return jnp.where(y > 0, y, NEG_SLOPE * y)

    # Preferred path: fold params once, then apply.
    encoder = make_observation_encoder(weight, bias)
    out = jax.block_until_ready(encoder(x))
    assert out.shape == (batch, seq, d_model)
    assert jnp.allclose(out, ref_fn(x), atol=1e-5, rtol=1e-5)

    # One-shot path + a row count that is NOT a multiple of fold (tail handling).
    x_odd = jax.random.normal(k_x, (3, 7, in_features), jnp.float32)
    out_odd = jax.block_until_ready(observation_encoder(x_odd, weight, bias))
    assert out_odd.shape == (3, 7, d_model)
    assert jnp.allclose(out_odd, ref_fn(x_odd), atol=1e-5, rtol=1e-5)

    print("KERNEL_OK")
</pallas_src>

<mosaic_0001>
module attributes {stable_mosaic.version = 11 : i64} {
  func.func @_encoder_kernel(%arg0: i32, %arg1: memref<8x16xf32, #tpu.memory_space<vmem>>, %arg2: memref<16x128xf32, #tpu.memory_space<vmem>>, %arg3: memref<1x128xf32, #tpu.memory_space<vmem>>, %arg4: memref<8x128xf32, #tpu.memory_space<vmem>>) attributes {dimension_semantics = [#tpu.dimension_semantics<parallel>], iteration_bounds = array<i64: 1>, scalar_prefetch = 0 : i64, scratch_operands = 0 : i64, tpu.core_type = #tpu.core_type<tc>, window_params = [{transform_indices = @transform_0, window_bounds = array<i64: 8, 16>}, {pipeline_mode = #tpu.pipeline_mode<synchronous>, transform_indices = @transform_1, window_bounds = array<i64: 16, 128>}, {pipeline_mode = #tpu.pipeline_mode<synchronous>, transform_indices = @transform_2, window_bounds = array<i64: 1, 128>}, {transform_indices = @transform_3, window_bounds = array<i64: 8, 128>}]} {
    %c0 = arith.constant 0 : index
    %c0_0 = arith.constant 0 : index
    %0 = vector.load %arg1[%c0, %c0_0] : memref<8x16xf32, #tpu.memory_space<vmem>>, vector<8x16xf32>
    %c0_1 = arith.constant 0 : index
    %c0_2 = arith.constant 0 : index
    %1 = vector.load %arg2[%c0_1, %c0_2] : memref<16x128xf32, #tpu.memory_space<vmem>>, vector<16x128xf32>
    %cst = arith.constant dense<0.000000e+00> : vector<8x128xf32>
    %2 = tpu.matmul %0, %1, %cst {dimension_numbers = #tpu.dot_dimension_numbers<[1], [0], [0], [1], [0, 0, 1, 1], [], []>} : vector<8x16xf32>, vector<16x128xf32>, vector<8x128xf32> -> vector<8x128xf32>
    %c0_3 = arith.constant 0 : index
    %c0_4 = arith.constant 0 : index
    %3 = vector.load %arg3[%c0_3, %c0_4] : memref<1x128xf32, #tpu.memory_space<vmem>>, vector<1x128xf32>
    %4 = vector.broadcast %3 : vector<1x128xf32> to vector<8x128xf32>
    %5 = arith.addf %2, %4 : vector<8x128xf32>
    %cst_5 = arith.constant 0.00999999977 : f32
    %6 = vector.broadcast %cst_5 : f32 to vector<8x128xf32>
    %7 = arith.mulf %6, %5 : vector<8x128xf32>
    %8 = arith.maximumf %5, %7 : vector<8x128xf32>
    %c0_6 = arith.constant 0 : index
    %c0_7 = arith.constant 0 : index
    %9 = vector.load %arg4[%c0_6, %c0_7] : memref<8x128xf32, #tpu.memory_space<vmem>>, vector<8x128xf32>
    tpu.vector_store %arg4[%c0_6, %c0_7], %8 {strides = array<i32>} : memref<8x128xf32, #tpu.memory_space<vmem>>, vector<8x128xf32>,
    return
  }
  func.func @transform_0(%arg0: i32) -> (i32, i32) {
    %c0_i32 = arith.constant 0 : i32
    %c0_i32_0 = arith.constant 0 : i32
    return %arg0, %c0_i32 : i32, i32
  }
  func.func @transform_1(%arg0: i32) -> (i32, i32) {
    %c0_i32 = arith.constant 0 : i32
    %c0_i32_0 = arith.constant 0 : i32
    %c0_i32_1 = arith.constant 0 : i32
    return %c0_i32, %c0_i32_0 : i32, i32
  }
  func.func @transform_2(%arg0: i32) -> (i32, i32) {
    %c0_i32 = arith.constant 0 : i32
    %c0_i32_0 = arith.constant 0 : i32
    %c0_i32_1 = arith.constant 0 : i32
    return %c0_i32, %c0_i32_0 : i32, i32
  }
  func.func @transform_3(%arg0: i32) -> (i32, i32) {
    %c0_i32 = arith.constant 0 : i32
    %c0_i32_0 = arith.constant 0 : i32
    return %arg0, %c0_i32 : i32, i32
  }
}

</mosaic_0001>

<llo_original>
// kernel: apply.1
$region0: #{apply.1}
  #allocation0 [shape = 'u32[]', space=smem, size = 0x4, offset = 0x4, fixed_abs, tag = 'smem constant byte address 0x4 - core index']
  #allocation1 [shape = 'u32[72,128]{1,0:T(1,128)}', space=vmem, size = 0x9000, scoped, tag = 'internal scratch']
  %s0 = inlined_call_operand.vmem [shape: f32[4,16], index: 0, kind: input, shape index: {}]
  %s1 = inlined_call_operand.vmem [shape: f32[16,128], index: 1, kind: input, shape index: {}]
  %s2 = inlined_call_operand.vmem [shape: f32[1,128], index: 2, kind: input, shape index: {}]
  %s3 = inlined_call_operand.vmem [shape: f32[4,128], index: 3, kind: output, shape index: {}]
  %s4 = sld [smem:[#allocation0]]
  $region52: #{apply.1} parent=0
    _
  %s6 = ssub.s32 1, %s4
  %s7 = scalar_select 0, %s6, %s4
  $region1: #{apply.1} parent=0
    #allocation2 [shape = 'u8[4096]{0}', space=vmem, size = 0x1000, scoped, tag = 'output window, operand 0, single buffered']
    // Predicated region
    $region2: #{apply.1} parent=1 // pred_check
      _
    $region3: #{apply.1} parent=1 // pred_check_branch
      %9 = sbr.rel (0) target = $region5
    $region4: #{apply.1} parent=1 // pred_region
      _
    $region5: #{apply.1} parent=1 // pred_fallthru
      _
    // Predicated region
    $region6: #{apply.1} parent=1 // pred_check
      _
    $region7: #{apply.1} parent=1 // pred_check_branch
      %11 = sbr.rel (0) target = $region9
    $region8: #{apply.1} parent=1 // pred_region
      _
    $region9: #{apply.1} parent=1 // pred_fallthru
      _
    // Predicated region
    $region10: #{apply.1} parent=1 // pred_check
      _
    $region11: #{apply.1} parent=1 // pred_check_branch
      %13 = sbr.rel (0) target = $region13
    $region12: #{apply.1} parent=1 // pred_region
      _
    $region13: #{apply.1} parent=1 // pred_fallthru
      _
    %v14 = vld [vmem:[%s0] sm:$0xff]
    %v15 = vld [vmem:[%s1] sm:$0xff]
    %v16 = vld [vmem:[%s1 + $0x8] sm:$0xff]
    %v17 = vld [vmem:[%s2] sm:$0x1]
    %v19 = vperm.slane %v17, 0
    %vm21 = vcmask 130048
    %v23 = vsel %vm21, %v14, 0
    %25 = vmatpush.msra.mxu0 0.0
    %26 = vmatpush.msra.mxu0 0.0
    %27 = vmatpush.msra.mxu0 0.0
    %28 = vmatpush.msra.mxu0 0.0
    %29 = vmatpush.msra.mxu0 0.0
    %30 = vmatpush.msra.mxu0 0.0
    %31 = vmatpush.msra.mxu0 0.0
    %32 = vmatpush.msra.mxu0 0.0
    %33 = vmatpush.msra.mxu0 0.0
    %34 = vmatpush.msra.mxu0 0.0
    %35 = vmatpush.msra.mxu0 0.0
    %36 = vmatpush.msra.mxu0 0.0
    %37 = vmatpush.msra.mxu0 0.0
    %38 = vmatpush.msra.mxu0 0.0
    %39 = vmatpush.msra.mxu0 %v16
    %40 = vmatpush.msra.mxu0 %v15
    %41 = vmatmul.f32.gmra.mxu0 %v23
    %v42 = vpop.f32.mrf.mxu0
    %v43 = vadd.f32 %v19, %v42
    %44 = vdwg.mxu0
    %v45 = vmul.f32 %v43, 0.01
    %v46 = vmax.f32 %v43, %v45
    %47 = vst [vmem:[#allocation2] sm:$0xff] %v46
    // Predicated region
    $region14: #{apply.1} parent=1 // pred_check
      _
    $region15: #{apply.1} parent=1 // pred_check_branch
      %49 = sbr.rel (0) target = $region17
    $region16: #{apply.1} parent=1 // pred_region
      // Predicated region
      $region18: #{apply.1} parent=16 // pred_check
        _
      $region19: #{apply.1} parent=16 // pred_check_branch
        %51 = sbr.rel (0) target = $region21
      $region20: #{apply.1} parent=16 // pred_region
        // Predicated region
        $region22: #{apply.1} parent=20 // pred_check
          _
        $region23: #{apply.1} parent=20 // pred_check_branch
          %53 = sbr.rel target = $region25
        $region24: #{apply.1} parent=20 // pred_region
          // Predicated region
          $region37: #{apply.1} parent=24 // pred_check
            _
          $region38: #{apply.1} parent=24 // pred_check_branch
            %69 = sbr.rel (0) target = $region40
          $region39: #{apply.1} parent=24 // pred_region
            %s71 = ssub.s32 16, 1
            loop: start=0, step=1, limit=1
            $region41: #{apply.1} parent=39 // loop_pre_header
              _
            $region42: #{apply.1} parent=39 // loop_header
              %s73 = sphi 0, %s77
              %p74 = scmp.ge.s32.totalorder %s73, 1
              %s78 = sphi [#allocation2], [#allocation2]
              %s79 = sphi %s3, %s3
            $region43: #{apply.1} parent=39 // loop_header_branch
              %76 = sbr.rel (%p74) target = $region47
            $region44: #{apply.1} parent=39 // loop_body
              %v80 = vld [vmem:[%s78] sm:%s71]
              %81 = vst [vmem:[%s79] sm:%s71] %v80
            $region45: #{apply.1} parent=39 // loop_footer
              %s77 = sadd.s32 1, %s73
            $region46: #{apply.1} parent=39 // loop_footer_branch
              %72 = sbr.rel target = $region42
            $region47: #{apply.1} parent=39 // loop_exit
              _
          $region40: #{apply.1} parent=24 // pred_fallthru
            _
        $region25: #{apply.1} parent=20 // pred_fallthru
          _
        // Predicated region
        $region26: #{apply.1} parent=20 // pred_check
          _
        $region27: #{apply.1} parent=20 // pred_check_branch
          %55 = sbr.rel (0) target = $region29
        $region28: #{apply.1} parent=20 // pred_region
          %s57 = ssub.s32 16, 1
          loop: start=0, step=1, limit=1
          $region30: #{apply.1} parent=28 // loop_pre_header
            _
          $region31: #{apply.1} parent=28 // loop_header
            %s59 = sphi 0, %s63
            %p60 = scmp.ge.s32.totalorder %s59, 1
            %s64 = sphi [#allocation2], [#allocation2]
            %s65 = sphi %s3, %s3
          $region32: #{apply.1} parent=28 // loop_header_branch
            %62 = sbr.rel (%p60) target = $region36
          $region33: #{apply.1} parent=28 // loop_body
            %v66 = vld [vmem:[%s64] sm:%s57]
            %67 = vst [vmem:[%s65] sm:%s57] %v66
          $region34: #{apply.1} parent=28 // loop_footer
            %s63 = sadd.s32 1, %s59
          $region35: #{apply.1} parent=28 // loop_footer_branch
            %58 = sbr.rel target = $region31
          $region36: #{apply.1} parent=28 // loop_exit
            _
        $region29: #{apply.1} parent=20 // pred_fallthru
          _
      $region21: #{apply.1} parent=16 // pred_fallthru
        _
      %82 = vnop
    $region17: #{apply.1} parent=1 // pred_fallthru
      _
    // Predicated region
    $region48: #{apply.1} parent=1 // pred_check
      _
    $region49: #{apply.1} parent=1 // pred_check_branch
      %84 = sbr.rel (0) target = $region51
    $region50: #{apply.1} parent=1 // pred_region
      _
    $region51: #{apply.1} parent=1 // pred_fallthru
      _

</llo_original>
